<compile_context>
chip_gen: v7x
topology: tpu7x:2x2x1
jax: 0.10.0
libtpu: 0.0.40
codegen_flags: <defaults>
</compile_context>

<pallas_src>
import jax
import jax.numpy as jnp
from jax.experimental import pallas as pl
from jax.experimental.pallas import tpu as pltpu

NEG_SLOPE = 0.01   # torch.nn.functional.leaky_relu default
LANES = 128        # TPU lane width; feature dims are padded to this in VMEM only
CARRIER = LANES - 1  # lane index of the constant-1 bias carrier


def _round_up(x, m):
    return -(-x // m) * m


def _mlp_kernel(x_ref, w_ref, out_ref):
    """Fused MLP forward on one batch tile.

    x_ref  : (B_tile, in_dim)           narrow, unpadded activations
    w_ref  : (n_layers, LANES, LANES)   bf16; bias in row CARRIER, w[CARRIER,CARRIER]=1
    out_ref: (B_tile, out_dim)          narrow output
    """
    n_layers = w_ref.shape[0]            # static python ints
    in_dim = x_ref.shape[-1]
    out_lanes = out_ref.shape[-1]

    # Layer 0: narrow input against the top in_dim rows of the packed weight,
    # then a single broadcast add of the fused bias/carrier row (row CARRIER).
    # That add both applies L0's bias and seeds the constant-1 carrier lane.
    h = jnp.dot(
        x_ref[...].astype(jnp.bfloat16),
        w_ref[0, :in_dim, :],
        preferred_element_type=jnp.float32,
    )
    h = h + w_ref[0, CARRIER:CARRIER + 1, :].astype(jnp.float32)

    # Remaining layers: leaky_relu (f32, VPU) then a bf16 MXU matmul; the bias
    # rides row CARRIER of the weight (carrier lane stays exactly 1.0).
    for i in range(1, n_layers):
        h = jnp.where(h >= 0, h, NEG_SLOPE * h)
        h = jnp.dot(h.astype(jnp.bfloat16), w_ref[i],
                    preferred_element_type=jnp.float32)

    out_ref[...] = h[:, :out_lanes].astype(out_ref.dtype)


def init_nn_q_params(key, in_size, out_size, layers):
    """Mimics nn.Linear default init (uniform +-1/sqrt(fan_in)).

    Returns a list of (W_transposed(in, out), bias(out,)) in float32.
    """
    sizes = []
    cur = in_size
    for h in layers:
        sizes.append((cur, h))
        cur = h
    sizes.append((cur, out_size))

    params = []
    for fan_in, fan_out in sizes:
        key, kw, kb = jax.random.split(key, 3)
        bound = 1.0 / jnp.sqrt(jnp.float32(fan_in))
        w = jax.random.uniform(
            kw, (fan_in, fan_out), jnp.float32, minval=-bound, maxval=bound
        )
        b = jax.random.uniform(
            kb, (fan_out,), jnp.float32, minval=-bound, maxval=bound
        )
        params.append((w, b))
    return params


def pack_nn_q_params(params, dtype=jnp.bfloat16):
    """Pack per-layer (W(in,out), b(out,)) into one zero-padded bf16 stack.

    Layout per layer i (LANES x LANES):
      rows [0, fan_in)        : W_i
      row  CARRIER, cols<fout : b_i
      [CARRIER, CARRIER]      : 1.0   (keeps the constant-1 carrier lane alive)
      everything else         : 0.0
    """
    n_layers = len(params)
    w_stack = jnp.zeros((n_layers, LANES, LANES), jnp.float32)
    for i, (w, b) in enumerate(params):
        fin, fout = w.shape
        # TODO(synk): feature dims > 127 would need an extra K/N grid axis.
        assert fin <= CARRIER and fout <= CARRIER
        w_stack = w_stack.at[i, :fin, :fout].set(w.astype(jnp.float32))
        w_stack = w_stack.at[i, CARRIER, :fout].set(b.astype(jnp.float32))
        w_stack = w_stack.at[i, CARRIER, CARRIER].set(1.0)
    return w_stack.astype(dtype)


def nn_q_forward(x, w_stack, out_dim, *, batch_tile=1024, small_batch_max=256):
    """Fused NN_Q forward. x: (B, in_dim) -> (B, out_dim) float32."""
    B, in_dim = x.shape
    n_layers = int(w_stack.shape[0])
    assert in_dim <= CARRIER and out_dim <= CARRIER
    x = x.astype(jnp.float32)

    w_bytes = w_stack.size * w_stack.dtype.itemsize
    cost = pl.CostEstimate(
        flops=2 * B * n_layers * LANES * LANES,
        transcendentals=0,
        bytes_accessed=4 * B * (in_dim + out_dim) + w_bytes,
    )

    if B <= small_batch_max:
        # Action-selection path: one grid-free call, full VMEM blocks, narrow
        # in/out, zero wrapper XLA ops.
        return pl.pallas_call(
            _mlp_kernel,
            out_shape=jax.ShapeDtypeStruct((B, out_dim), jnp.float32),
            in_specs=[
                pl.BlockSpec(memory_space=pltpu.MemorySpace.VMEM),
                pl.BlockSpec(memory_space=pltpu.MemorySpace.VMEM),
            ],
            out_specs=pl.BlockSpec(memory_space=pltpu.MemorySpace.VMEM),
            cost_estimate=cost,
        )(x, w_stack)

    # Training-minibatch path: batch tiled as a parallel grid axis (>=2 even
    # steps so both v7x TensorCores engage); weights pinned / DMA'd once.
    grid_b = max(2, pl.cdiv(B, batch_tile))
    if grid_b % 2:
        grid_b += 1                       # even split across 2 TCs
    tile = _round_up(pl.cdiv(B, grid_b), 8)
    b_pad = tile * grid_b
    x_in = x if b_pad == B else jnp.pad(x, ((0, b_pad - B), (0, 0)))

    out = pl.pallas_call(
        _mlp_kernel,
        out_shape=jax.ShapeDtypeStruct((b_pad, out_dim), jnp.float32),
        grid=(grid_b,),
        in_specs=[
            pl.BlockSpec((tile, in_dim), lambda i: (i, 0)),
            pl.BlockSpec((n_layers, LANES, LANES), lambda i: (0, 0, 0)),
        ],
        out_specs=pl.BlockSpec((tile, out_dim), lambda i: (i, 0)),
        compiler_params=pltpu.CompilerParams(
            dimension_semantics=("parallel",)
        ),
        cost_estimate=cost,
    )(x_in, w_stack)
    return out if b_pad == B else out[:B]


def nn_q_reference_bf16(x, params):
    """Pure-JAX reference mirroring the kernel's bf16-operand / f32-accum math."""
    h = x.astype(jnp.float32)
    for i, (w, b) in enumerate(params):
        if i > 0:
            h = jnp.where(h >= 0, h, NEG_SLOPE * h)
        h = jnp.dot(h.astype(jnp.bfloat16), w.astype(jnp.bfloat16),
                    preferred_element_type=jnp.float32)
        h = h + b.astype(jnp.bfloat16).astype(jnp.float32)
    return h


def nn_q_reference_f32(x, params):
    """Full-f32 reference of the PyTorch module's forward."""
    h = x.astype(jnp.float32)
    for i, (w, b) in enumerate(params):
        if i > 0:
            h = jnp.where(h >= 0, h, NEG_SLOPE * h)
        h = h @ w + b
    return h


if __name__ == "__main__":
    # CartPole-like DQN: state dim 4, 2 actions, two hidden layers of 32.
    in_size, out_size, hidden = 4, 2, [32, 32]

    key = jax.random.PRNGKey(0)
    key, kx = jax.random.split(key)
    params = init_nn_q_params(key, in_size, out_size, hidden)
    w_stack = pack_nn_q_params(params)

    # Small-batch (action-selection) path: grid-free, single VMEM block call.
    batch = 8
    x = jax.random.normal(kx, (batch, in_size), jnp.float32)
    out = jax.block_until_ready(nn_q_forward(x, w_stack, out_size))
    assert out.shape == (batch, out_size)
    assert jnp.allclose(out, nn_q_reference_bf16(x, params), atol=1e-4, rtol=1e-4)
    assert jnp.allclose(out, nn_q_reference_f32(x, params), atol=1e-1, rtol=1e-1)

    # Large-batch (training minibatch) path: batch tiled as a parallel grid axis.
    key, kx2 = jax.random.split(key)
    xb = jax.random.normal(kx2, (512, in_size), jnp.float32)
    outb = jax.block_until_ready(
        nn_q_forward(xb, w_stack, out_size, batch_tile=128)
    )
    assert outb.shape == (512, out_size)
    assert jnp.allclose(outb, nn_q_reference_bf16(xb, params), atol=1e-4, rtol=1e-4)
    assert jnp.allclose(outb, nn_q_reference_f32(xb, params), atol=1e-1, rtol=1e-1)

    print("KERNEL_OK")
</pallas_src>

<mosaic_0001>
module attributes {stable_mosaic.version = 11 : i64} {
  func.func @_mlp_kernel(%arg0: memref<8x4xf32, #tpu.memory_space<vmem>>, %arg1: memref<3x128x128xbf16, #tpu.memory_space<vmem>>, %arg2: memref<8x2xf32, #tpu.memory_space<vmem>>) attributes {dimension_semantics = [], scalar_prefetch = 0 : i64, scratch_operands = 0 : i64, tpu.core_type = #tpu.core_type<tc>} {
    %c0 = arith.constant 0 : index
    %c0_0 = arith.constant 0 : index
    %0 = vector.load %arg0[%c0, %c0_0] : memref<8x4xf32, #tpu.memory_space<vmem>>, vector<8x4xf32>
    %1 = arith.truncf %0 : vector<8x4xf32> to vector<8x4xbf16>
    %c0_1 = arith.constant 0 : index
    %c0_2 = arith.constant 0 : index
    %c0_3 = arith.constant 0 : index
    %2 = vector.load %arg1[%c0_1, %c0_2, %c0_3] : memref<3x128x128xbf16, #tpu.memory_space<vmem>>, vector<1x4x128xbf16>
    %3 = vector.shape_cast %2 : vector<1x4x128xbf16> to vector<4x128xbf16>
    %cst = arith.constant dense<0.000000e+00> : vector<8x128xf32>
    %4 = tpu.matmul %1, %3, %cst {dimension_numbers = #tpu.dot_dimension_numbers<[1], [0], [0], [1], [0, 0, 1, 1], [], []>} : vector<8x4xbf16>, vector<4x128xbf16>, vector<8x128xf32> -> vector<8x128xf32>
    %c0_4 = arith.constant 0 : index
    %c127 = arith.constant 127 : index
    %c0_5 = arith.constant 0 : index
    %5 = vector.load %arg1[%c0_4, %c127, %c0_5] : memref<3x128x128xbf16, #tpu.memory_space<vmem>>, vector<1x1x128xbf16>
    %6 = vector.shape_cast %5 : vector<1x1x128xbf16> to vector<1x128xbf16>
    %7 = arith.extf %6 : vector<1x128xbf16> to vector<1x128xf32>
    %8 = vector.broadcast %7 : vector<1x128xf32> to vector<8x128xf32>
    %9 = arith.addf %4, %8 : vector<8x128xf32>
    %cst_6 = arith.constant 0.000000e+00 : f32
    %10 = vector.broadcast %cst_6 : f32 to vector<8x128xf32>
    %11 = arith.cmpf oge, %9, %10 : vector<8x128xf32>
    %cst_7 = arith.constant 0.00999999977 : f32
    %12 = vector.broadcast %cst_7 : f32 to vector<8x128xf32>
    %13 = arith.mulf %12, %9 : vector<8x128xf32>
    %14 = arith.select %11, %9, %13 : vector<8x128xi1>, vector<8x128xf32>
    %15 = arith.truncf %14 : vector<8x128xf32> to vector<8x128xbf16>
    %c1 = arith.constant 1 : index
    %c0_8 = arith.constant 0 : index
    %c0_9 = arith.constant 0 : index
    %16 = vector.load %arg1[%c1, %c0_8, %c0_9] : memref<3x128x128xbf16, #tpu.memory_space<vmem>>, vector<1x128x128xbf16>
    %17 = vector.shape_cast %16 : vector<1x128x128xbf16> to vector<128x128xbf16>
    %cst_10 = arith.constant dense<0.000000e+00> : vector<8x128xf32>
    %18 = tpu.matmul %15, %17, %cst_10 {dimension_numbers = #tpu.dot_dimension_numbers<[1], [0], [0], [1], [0, 0, 1, 1], [], []>} : vector<8x128xbf16>, vector<128x128xbf16>, vector<8x128xf32> -> vector<8x128xf32>
    %cst_11 = arith.constant 0.000000e+00 : f32
    %19 = vector.broadcast %cst_11 : f32 to vector<8x128xf32>
    %20 = arith.cmpf oge, %18, %19 : vector<8x128xf32>
    %cst_12 = arith.constant 0.00999999977 : f32
    %21 = vector.broadcast %cst_12 : f32 to vector<8x128xf32>
    %22 = arith.mulf %21, %18 : vector<8x128xf32>
    %23 = arith.select %20, %18, %22 : vector<8x128xi1>, vector<8x128xf32>
    %24 = arith.truncf %23 : vector<8x128xf32> to vector<8x128xbf16>
    %c2 = arith.constant 2 : index
    %c0_13 = arith.constant 0 : index
    %c0_14 = arith.constant 0 : index
    %25 = vector.load %arg1[%c2, %c0_13, %c0_14] : memref<3x128x128xbf16, #tpu.memory_space<vmem>>, vector<1x128x128xbf16>
    %26 = vector.shape_cast %25 : vector<1x128x128xbf16> to vector<128x128xbf16>
    %cst_15 = arith.constant dense<0.000000e+00> : vector<8x128xf32>
    %27 = tpu.matmul %24, %26, %cst_15 {dimension_numbers = #tpu.dot_dimension_numbers<[1], [0], [0], [1], [0, 0, 1, 1], [], []>} : vector<8x128xbf16>, vector<128x128xbf16>, vector<8x128xf32> -> vector<8x128xf32>
    %28 = vector.extract_strided_slice %27 {offsets = [0, 0], sizes = [8, 2], strides = [1, 1]} : vector<8x128xf32> to vector<8x2xf32>
    %c0_16 = arith.constant 0 : index
    %c0_17 = arith.constant 0 : index
    %29 = vector.load %arg2[%c0_16, %c0_17] : memref<8x2xf32, #tpu.memory_space<vmem>>, vector<8x2xf32>
    tpu.vector_store %arg2[%c0_16, %c0_17], %28 {strides = array<i32>} : memref<8x2xf32, #tpu.memory_space<vmem>>, vector<8x2xf32>,
    return
  }
}

</mosaic_0001>

<llo_original>
// kernel: tpu_custom_call.1
$region0: #{tpu_custom_call.1}
  #allocation0 [shape = 'u32[]', space=smem, size = 0x4, offset = 0x4, fixed_abs, tag = 'smem constant byte address 0x4 - core index']
  #allocation1 [shape = 'u32[144,128]{1,0:T(1,128)}', space=vmem, size = 0x12000, scoped, tag = 'internal scratch']
  %s0 = inlined_call_operand.vmem [shape: f32[8,4], index: 0, kind: input, shape index: {}]
  %s1 = inlined_call_operand.hbm [shape: bf16[3,128,128], index: 1, kind: input, shape index: {}]
  %s2 = inlined_call_operand.vmem [shape: f32[8,2], index: 2, kind: output, shape index: {}]
  %s3 = sld [smem:[#allocation0]]
  $region22: #{tpu_custom_call.1} parent=0
    _
  %s5 = ssub.s32 1, %s3
  %s6 = scalar_select 0, %s5, %s3
  $region1: #{tpu_custom_call.1} parent=0
    #allocation2 [shape = 'u8[98304]{0}', space=vmem, size = 0x18000, scoped, tag = 'input window, operand 1, single buffered']
    #allocation3 [shape = 's32[1]{0}', space=sflag, size = 0x4, scoped, tag = 'scoped memory for tpu_custom_call.1']
    %7 = vsyncpa [#allocation3], 0
    // Predicated region
    $region2: #{tpu_custom_call.1} parent=1 // pred_check
      _
    $region3: #{tpu_custom_call.1} parent=1 // pred_check_branch
      %9 = sbr.rel (0) target = $region5
    $region4: #{tpu_custom_call.1} parent=1 // pred_region
      _
    $region5: #{tpu_custom_call.1} parent=1 // pred_fallthru
      _
    // Predicated region
    $region6: #{tpu_custom_call.1} parent=1 // pred_check
      _
    $region7: #{tpu_custom_call.1} parent=1 // pred_check_branch
      %11 = sbr.rel (0) target = $region9
    $region8: #{tpu_custom_call.1} parent=1 // pred_region
      %s13 = ssub.s32 3072, 3072
      %14 = vsyncadd [#allocation3], %s13
      %s15 = sshll.u32 [#allocation2], 4
      %s16 = int_to_ptr.vmem [resolvable:$true] %s15
      %21 = dma.hbm_to_vmem [thread:$0]  %s1, 3072, %s16, [#allocation3], 64, 64, 4
    $region9: #{tpu_custom_call.1} parent=1 // pred_fallthru
      _
    // Predicated region
    $region10: #{tpu_custom_call.1} parent=1 // pred_check
      _
    $region11: #{tpu_custom_call.1} parent=1 // pred_check_branch
      %23 = sbr.rel (0) target = $region13
    $region12: #{tpu_custom_call.1} parent=1 // pred_region
      %24 = dma.done [#allocation3], 3072
    $region13: #{tpu_custom_call.1} parent=1 // pred_fallthru
      _
    %v26 = vld [vmem:[%s0] sm:$0xff]
    %v27 = vpack.c.bf16 %v26, %v26
    %v28 = vld [vmem:[#allocation2] sm:$0x3]
    %v29 = vld [vmem:[#allocation2 + $0x3c] sm:$0x8]
    %v30 = vunpack.c.l.bf16 %v29
    %v31 = vlaneseq
    %v32 = vshrl.u32 %v31, 7
    %v33 = vsub.s32 7, %v32
    %v34 = vrot.slane %v30, %v33
    %vm35 = vcmask 31744
    %v37 = vsel %vm35, %v27, 0
    %vm39 = vcmask 1041408
    %v41 = vsel %vm39, %v28, 0
    %43 = vmatprep.subr.bf16.mxu0 0
    %44 = vmatpush1.bf16.msra.mxu0 %v41
    %45 = vmatprep.subr.bf16.mxu0 0
    %46 = vmatpush1.bf16.msra.mxu0 0
    %47 = vmatprep.subr.bf16.mxu0 0
    %48 = vmatpush1.bf16.msra.mxu0 0
    %49 = vmatprep.subr.bf16.mxu0 0
    %50 = vmatpush1.bf16.msra.mxu0 0
    %51 = vmatprep.subr.bf16.mxu0 0
    %52 = vmatpush1.bf16.msra.mxu0 0
    %53 = vmatprep.subr.bf16.mxu0 0
    %54 = vmatpush1.bf16.msra.mxu0 0
    %55 = vmatprep.subr.bf16.mxu0 0
    %56 = vmatpush1.bf16.msra.mxu0 0
    %57 = vmatprep.subr.bf16.mxu0 0
    %58 = vmatpush1.bf16.msra.mxu0 0
    %59 = vmatprep.subr.bf16.mxu0 0
    %60 = vmatpush1.bf16.msra.mxu0 0
    %61 = vmatprep.subr.bf16.mxu0 0
    %62 = vmatpush1.bf16.msra.mxu0 0
    %63 = vmatprep.subr.bf16.mxu0 0
    %64 = vmatpush1.bf16.msra.mxu0 0
    %65 = vmatprep.subr.bf16.mxu0 0
    %66 = vmatpush1.bf16.msra.mxu0 0
    %67 = vmatprep.subr.bf16.mxu0 0
    %68 = vmatpush1.bf16.msra.mxu0 0
    %69 = vmatprep.subr.bf16.mxu0 0
    %70 = vmatpush1.bf16.msra.mxu0 0
    %71 = vmatprep.subr.bf16.mxu0 0
    %72 = vmatpush1.bf16.msra.mxu0 0
    %73 = vmatprep.subr.bf16.mxu0 0
    %74 = vmatpush1.bf16.msra.mxu0 0
    %75 = vmatprep.mubr.bf16.mxu0 0
    %76 = vmatmul.mubr.bf16.gmra.mrb[0].mxu0 %v37
    %v77 = vpop.f32.mrb[0].mxu0
    %v78 = vadd.f32 %v34, %v77
    %v79 = vpop.f32.mrb[0].mxu0
    %v80 = vpop.f32.mrb[0].mxu0
    %v81 = vpop.f32.mrb[0].mxu0
    %82 = vdwg.mxu0
    %vm83 = vcmp.ge.f32.partialorder %v78, 0.0
    %v84 = vmul.f32 %v78, 0.01
    %v85 = vsel %vm83, %v78, %v84
    %v86 = vpack.c.bf16 %v85, %v85
    %s87 = scalar_lea.vmem [#allocation2], 64
    %v88 = vld [vmem:[%s87] sm:$0xf]
    %v89 = vld [vmem:[%s87 + $0x4] sm:$0xf]
    %v90 = vld [vmem:[%s87 + $0x8] sm:$0xf]
    %v91 = vld [vmem:[%s87 + $0xc] sm:$0xf]
    %v92 = vld [vmem:[%s87 + $0x10] sm:$0xf]
    %v93 = vld [vmem:[%s87 + $0x14] sm:$0xf]
    %v94 = vld [vmem:[%s87 + $0x18] sm:$0xf]
    %v95 = vld [vmem:[%s87 + $0x1c] sm:$0xf]
    %v96 = vld [vmem:[%s87 + $0x20] sm:$0xf]
    %v97 = vld [vmem:[%s87 + $0x24] sm:$0xf]
    %v98 = vld [vmem:[%s87 + $0x28] sm:$0xf]
    %v99 = vld [vmem:[%s87 + $0x2c] sm:$0xf]
    %v100 = vld [vmem:[%s87 + $0x30] sm:$0xf]
    %v101 = vld [vmem:[%s87 + $0x34] sm:$0xf]
    %v102 = vld [vmem:[%s87 + $0x38] sm:$0xf]
    %v103 = vld [vmem:[%s87 + $0x3c] sm:$0xf]
    %v120 = vunpack.c.l.b16 %v88
    %v121 = vunpack.c.l.b16 %v89
    %v122 = vunpack.c.l.b16 %v90
    %v123 = vunpack.c.l.b16 %v91
    %v124 = vunpack.c.l.b16 %v92
    %v125 = vunpack.c.l.b16 %v93
    %v126 = vunpack.c.l.b16 %v94
    %v127 = vunpack.c.l.b16 %v95
    %v128 = vunpack.c.l.b16 %v96
    %v129 = vunpack.c.l.b16 %v97
    %v130 = vunpack.c.l.b16 %v98
    %v131 = vunpack.c.l.b16 %v99
    %v132 = vunpack.c.l.b16 %v100
    %v133 = vunpack.c.l.b16 %v101
    %v134 = vunpack.c.l.b16 %v102
    %v135 = vunpack.c.l.b16 %v103
    %v136 = vpack.c.b16 %v121, %v120
    %v137 = vpack.c.b16 %v123, %v122
    %v138 = vpack.c.b16 %v125, %v124
    %v139 = vpack.c.b16 %v127, %v126
    %v140 = vpack.c.b16 %v129, %v128
    %v141 = vpack.c.b16 %v131, %v130
    %v142 = vpack.c.b16 %v133, %v132
    %v143 = vpack.c.b16 %v135, %v134
    %152 = vmatprep.subr.bf16.mxu0 0
    %153 = vmatpush1.bf16.msra.mxu0 %v136
    %154 = vmatprep.subr.bf16.mxu0 0
    %155 = vmatpush1.bf16.msra.mxu0 %v137
    %156 = vmatprep.subr.bf16.mxu0 0
    %157 = vmatpush1.bf16.msra.mxu0 %v138
    %158 = vmatprep.subr.bf16.mxu0 0
    %159 = vmatpush1.bf16.msra.mxu0 %v139
    %160 = vmatprep.subr.bf16.mxu0 0
    %161 = vmatpush1.bf16.msra.mxu0 %v140
    %162 = vmatprep.subr.bf16.mxu0 0
    %163 = vmatpush1.bf16.msra.mxu0 %v141
    %164 = vmatprep.subr.bf16.mxu0 0
    %165 = vmatpush1.bf16.msra.mxu0 %v142
    %166 = vmatprep.subr.bf16.mxu0 0
    %167 = vmatpush1.bf16.msra.mxu0 %v143
    %168 = vmatprep.subr.bf16.mxu0 0
    %169 = vmatpush1.bf16.msra.mxu0 0
    %170 = vmatprep.subr.bf16.mxu0 0
    %171 = vmatpush1.bf16.msra.mxu0 0
    %172 = vmatprep.subr.bf16.mxu0 0
    %173 = vmatpush1.bf16.msra.mxu0 0
    %174 = vmatprep.subr.bf16.mxu0 0
    %175 = vmatpush1.bf16.msra.mxu0 0
    %176 = vmatprep.subr.bf16.mxu0 0
    %177 = vmatpush1.bf16.msra.mxu0 0
    %178 = vmatprep.subr.bf16.mxu0 0
    %179 = vmatpush1.bf16.msra.mxu0 0
    %180 = vmatprep.subr.bf16.mxu0 0
    %181 = vmatpush1.bf16.msra.mxu0 0
    %182 = vmatprep.subr.bf16.mxu0 0
    %183 = vmatpush1.bf16.msra.mxu0 0
    %184 = vmatprep.mubr.bf16.mxu0 0
    %185 = vmatmul.mubr.bf16.gmra.mrb[0].mxu0 %v86
    %v186 = vpop.f32.mrb[0].mxu0
    %v187 = vadd.f32 0.0, %v186
    %v188 = vpop.f32.mrb[0].mxu0
    %v189 = vpop.f32.mrb[0].mxu0
    %v190 = vpop.f32.mrb[0].mxu0
    %191 = vdwg.mxu0
    %vm192 = vcmp.ge.f32.partialorder %v187, 0.0
    %v193 = vmul.f32 %v187, 0.01
    %v194 = vsel %vm192, %v187, %v193
    %v195 = vpack.c.bf16 %v194, %v194
    %s196 = scalar_lea.vmem [#allocation2], 128
    %v197 = vld [vmem:[%s196] sm:$0xf]
    %v198 = vld [vmem:[%s196 + $0x4] sm:$0xf]
    %v199 = vld [vmem:[%s196 + $0x8] sm:$0xf]
    %v200 = vld [vmem:[%s196 + $0xc] sm:$0xf]
    %v201 = vld [vmem:[%s196 + $0x10] sm:$0xf]
    %v202 = vld [vmem:[%s196 + $0x14] sm:$0xf]
    %v203 = vld [vmem:[%s196 + $0x18] sm:$0xf]
    %v204 = vld [vmem:[%s196 + $0x1c] sm:$0xf]
    %v205 = vld [vmem:[%s196 + $0x20] sm:$0xf]
    %v206 = vld [vmem:[%s196 + $0x24] sm:$0xf]
    %v207 = vld [vmem:[%s196 + $0x28] sm:$0xf]
    %v208 = vld [vmem:[%s196 + $0x2c] sm:$0xf]
    %v209 = vld [vmem:[%s196 + $0x30] sm:$0xf]
    %v210 = vld [vmem:[%s196 + $0x34] sm:$0xf]
    %v211 = vld [vmem:[%s196 + $0x38] sm:$0xf]
    %v212 = vld [vmem:[%s196 + $0x3c] sm:$0xf]
    %v229 = vunpack.c.l.b16 %v197
    %v230 = vunpack.c.l.b16 %v198
    %v231 = vunpack.c.l.b16 %v199
    %v232 = vunpack.c.l.b16 %v200
    %v233 = vunpack.c.l.b16 %v201
    %v234 = vunpack.c.l.b16 %v202
    %v235 = vunpack.c.l.b16 %v203
    %v236 = vunpack.c.l.b16 %v204
    %v237 = vunpack.c.l.b16 %v205
    %v238 = vunpack.c.l.b16 %v206
    %v239 = vunpack.c.l.b16 %v207
    %v240 = vunpack.c.l.b16 %v208
    %v241 = vunpack.c.l.b16 %v209
    %v242 = vunpack.c.l.b16 %v210
    %v243 = vunpack.c.l.b16 %v211
    %v244 = vunpack.c.l.b16 %v212
    %v245 = vpack.c.b16 %v230, %v229
    %v246 = vpack.c.b16 %v232, %v231
    %v247 = vpack.c.b16 %v234, %v233
    %v248 = vpack.c.b16 %v236, %v235
    %v249 = vpack.c.b16 %v238, %v237
    %v250 = vpack.c.b16 %v240, %v239
    %v251 = vpack.c.b16 %v242, %v241
    %v252 = vpack.c.b16 %v244, %v243
    %261 = vmatprep.subr.bf16.mxu0 0
    %262 = vmatpush1.bf16.msra.mxu0 %v245
    %263 = vmatprep.subr.bf16.mxu0 0
    %264 = vmatpush1.bf16.msra.mxu0 %v246
    %265 = vmatprep.subr.bf16.mxu0 0
    %266 = vmatpush1.bf16.msra.mxu0 %v247
    %267 = vmatprep.subr.bf16.mxu0 0
    %268 = vmatpush1.bf16.msra.mxu0 %v248
    %269 = vmatprep.subr.bf16.mxu0 0
    %270 = vmatpush1.bf16.msra.mxu0 %v249
    %271 = vmatprep.subr.bf16.mxu0 0
    %272 = vmatpush1.bf16.msra.mxu0 %v250
    %273 = vmatprep.subr.bf16.mxu0 0
    %274 = vmatpush1.bf16.msra.mxu0 %v251
    %275 = vmatprep.subr.bf16.mxu0 0
    %276 = vmatpush1.bf16.msra.mxu0 %v252
    %277 = vmatprep.subr.bf16.mxu0 0
    %278 = vmatpush1.bf16.msra.mxu0 0
    %279 = vmatprep.subr.bf16.mxu0 0
    %280 = vmatpush1.bf16.msra.mxu0 0
    %281 = vmatprep.subr.bf16.mxu0 0
    %282 = vmatpush1.bf16.msra.mxu0 0
    %283 = vmatprep.subr.bf16.mxu0 0
    %284 = vmatpush1.bf16.msra.mxu0 0
    %285 = vmatprep.subr.bf16.mxu0 0
    %286 = vmatpush1.bf16.msra.mxu0 0
    %287 = vmatprep.subr.bf16.mxu0 0
    %288 = vmatpush1.bf16.msra.mxu0 0
    %289 = vmatprep.subr.bf16.mxu0 0
    %290 = vmatpush1.bf16.msra.mxu0 0
    %291 = vmatprep.subr.bf16.mxu0 0
    %292 = vmatpush1.bf16.msra.mxu0 0
    %293 = vmatprep.mubr.bf16.mxu0 0
    %294 = vmatmul.mubr.bf16.gmra.mrb[0].mxu0 %v195
    %v295 = vpop.f32.mrb[0].mxu0
    %v296 = vadd.f32 0.0, %v295
    %v297 = vpop.f32.mrb[0].mxu0
    %v298 = vpop.f32.mrb[0].mxu0
    %v299 = vpop.f32.mrb[0].mxu0
    %300 = vdwg.mxu0
    %vm301 = vcmask 15360
    %302 = vst.msk [vmem:[%s2] sm:$0xff] %vm301, %v296
    // Predicated region
    $region14: #{tpu_custom_call.1} parent=1 // pred_check
      _
    $region15: #{tpu_custom_call.1} parent=1 // pred_check_branch
      %304 = sbr.rel (0) target = $region17
    $region16: #{tpu_custom_call.1} parent=1 // pred_region
      _
    $region17: #{tpu_custom_call.1} parent=1 // pred_fallthru
      _
    // Predicated region
    $region18: #{tpu_custom_call.1} parent=1 // pred_check
      _
    $region19: #{tpu_custom_call.1} parent=1 // pred_check_branch
      %306 = sbr.rel (0) target = $region21
    $region20: #{tpu_custom_call.1} parent=1 // pred_region
      _
    $region21: #{tpu_custom_call.1} parent=1 // pred_fallthru
      _
    %307 = vsyncpa [#allocation3], 1

</llo_original>
